<compile_context>
chip_gen: v6e
topology: v6e:2x2x1
jax: 0.10.0
libtpu: 0.0.40
codegen_flags: <defaults>
</compile_context>

<pallas_src>
import functools

import jax
import jax.numpy as jnp
from jax.experimental import pallas as pl
from jax.experimental.pallas import tpu as pltpu

# ----- boundary-condition constants (p1=(t_0, x_0), p2=(t_f, x_f)) -----------
T0, X0 = 0.0, 1.0
TF, XF = 2.0, 0.5
M_SLOPE = (XF - X0) / (TF - T0)          # m = (x_f - x_0) / (t_f - t_0)
C_INTER = X0 - M_SLOPE * T0              # c = x_0 - m * t_0

LANES = 128                              # batch mapped onto the 128-lane axis
SUBLANES = 8                             # sublane granularity for the row tile
HIDDEN = 8                               # in_proj output width


def _round_up(x: int, m: int) -> int:
    return ((x + m - 1) // m) * m


def nn_kernel(w1_ref, b1_ref, w2_ref, t_ref, o_ref):
    """Forward pass for one (tm, 128) lane-dense batch tile.

    w1_ref : SMEM (8,)    in_proj weight  (W_in[:, 0])
    b1_ref : SMEM (8,)    in_proj bias
    w2_ref : SMEM (8,)    out_proj weight (W_out[0, :]), no bias
    t_ref  : VMEM (tm, 128) input times (batch on sublanes x lanes)
    o_ref  : VMEM (tm, 128) output
    """
    t = t_ref[...]                                           # (tm, 128) f32
    # s = t / (1 - t): EUP approx reciprocal + one Newton-Raphson refinement
    # (~1e-8 relative error; the two extra FMAs hide under the 8 tanh pushes).
    d = 1.0 - t
    r = pl.reciprocal(d, approx=True)
    r = r * (2.0 - d * r)
    s = t * r

    # Tiny MLP entirely on VPU (FMA) + EUP (tanh): no MXU involvement.
    y = jnp.zeros_like(t)
    for k in range(HIDDEN):                                  # static unroll (8 units)
        h_k = jnp.tanh(s * w1_ref[k] + b1_ref[k])
        y = y + h_k * w2_ref[k]

    # Two-point boundary condition: m*t + c + (t - t0)*(t - tf)*y
    o_ref[...] = M_SLOPE * t + C_INTER + (t - T0) * (t - TF) * y


@functools.partial(jax.jit, static_argnames=("tm_max",))
def neural_network_forward(t, w_in, b_in, w_out, *, tm_max=2048):
    """t: (N, 1) float32. Parameters in PyTorch shapes:
       w_in (8, 1), b_in (8,), w_out (1, 8). Returns (N, 1) float32."""
    n = t.shape[0]

    # Flatten PyTorch-shaped parameters into 8 scalars each (SMEM residents).
    w1 = w_in.reshape(HIDDEN).astype(jnp.float32)
    b1 = b_in.reshape(HIDDEN).astype(jnp.float32)
    w2 = w_out.reshape(HIDDEN).astype(jnp.float32)

    # Lane-dense layout: pad only to a multiple of 128 (at most one row of
    # zeros; zeros are safe — t/(1-t)=0 there).  Skip the pad when aligned.
    rows = pl.cdiv(n, LANES)
    if n % LANES == 0:
        t2d = t.astype(jnp.float32).reshape(rows, LANES)
    else:
        t_flat = jnp.pad(t.reshape(-1).astype(jnp.float32), (0, rows * LANES - n))
        t2d = t_flat.reshape(rows, LANES)

    # Row-tile size (all static): as large as tm_max to amortize the per-step
    # pipeline cost, but capped so the grid keeps >= ~4 steps for v7x megacore.
    tm = min(tm_max, max(SUBLANES, _round_up(pl.cdiv(rows, 4), SUBLANES)))
    grid = (pl.cdiv(rows, tm),)                              # ragged last block OK

    n_elems = rows * LANES
    out2d = pl.pallas_call(
        nn_kernel,
        out_shape=jax.ShapeDtypeStruct((rows, LANES), jnp.float32),
        grid=grid,
        in_specs=[
            pl.BlockSpec(memory_space=pltpu.MemorySpace.SMEM),   # w1 (8,)
            pl.BlockSpec(memory_space=pltpu.MemorySpace.SMEM),   # b1 (8,)
            pl.BlockSpec(memory_space=pltpu.MemorySpace.SMEM),   # w2 (8,)
            pl.BlockSpec((tm, LANES), lambda i: (i, 0)),         # t tile
        ],
        out_specs=pl.BlockSpec((tm, LANES), lambda i: (i, 0)),
        compiler_params=pltpu.CompilerParams(
            # Independent batch tiles -> megacore sharding on v7x (2 TCs/EUPs).
            dimension_semantics=("parallel",),
        ),
        # Advisory hint so XLA overlaps the (rare) pad/slice and adjacent PINN
        # work with the kernel instead of serializing around it.
        cost_estimate=pl.CostEstimate(
            flops=40 * n_elems,
            transcendentals=9 * n_elems,        # 8 tanh + 1 reciprocal / element
            bytes_accessed=8 * n_elems,         # 4 B in + 4 B out / element
        ),
    )(w1, b1, w2, t2d)

    if rows * LANES == n:                       # aligned: no trailing-slice copy
        return out2d.reshape(n, 1)
    return out2d.reshape(-1)[:n].reshape(n, 1)


def reference_forward(t, w_in, b_in, w_out):
    """Pure-JAX reference mirroring the PyTorch module (elementwise form to
    avoid TPU reduced-precision matmul in the reference)."""
    s = t / (1.0 - t)                                        # (n, 1)
    h = jnp.tanh(s * w_in.reshape(1, HIDDEN) + b_in.reshape(1, HIDDEN))  # (n, 8)
    y = jnp.sum(h * w_out.reshape(1, HIDDEN), axis=-1, keepdims=True)    # (n, 1)
    return M_SLOPE * t + C_INTER + (t - T0) * (t - TF) * y


if __name__ == "__main__":
    key = jax.random.PRNGKey(0)
    k_t, k_w1, k_b1, k_w2 = jax.random.split(key, 4)

    # PyTorch parameter shapes: in_proj.weight (8,1), in_proj.bias (8,),
    # out_proj.weight (1,8) (no bias). nn.Linear init ~ U(-1/sqrt(fan_in), ·).
    w_in = jax.random.uniform(k_w1, (HIDDEN, 1), jnp.float32, -1.0, 1.0)       # fan_in = 1
    b_in = jax.random.uniform(k_b1, (HIDDEN,), jnp.float32, -1.0, 1.0)
    bound = 1.0 / jnp.sqrt(8.0)
    w_out = jax.random.uniform(k_w2, (1, HIDDEN), jnp.float32, -bound, bound)  # fan_in = 8

    # Small batch; n not a multiple of 128 exercises the padding path.
    # t in (0, 1) to avoid the t = 1 singularity of t/(1-t) (as in the module).
    n = 1000
    t = jax.random.uniform(k_t, (n, 1), jnp.float32, 0.05, 0.85)

    out = jax.block_until_ready(neural_network_forward(t, w_in, b_in, w_out))
    ref = reference_forward(t, w_in, b_in, w_out)
    assert out.shape == (n, 1) and out.dtype == jnp.float32
    assert jnp.allclose(out, ref, atol=1e-5, rtol=1e-5), float(jnp.max(jnp.abs(out - ref)))

    # Second check: multi-step grid + ragged last block (rows=20, tm=8 -> 3
    # steps, last block has 4 valid rows) to exercise masked write-back.
    n2 = 2500
    t2 = jax.random.uniform(k_t, (n2, 1), jnp.float32, 0.05, 0.85)
    out2 = jax.block_until_ready(
        neural_network_forward(t2, w_in, b_in, w_out, tm_max=8))
    ref2 = reference_forward(t2, w_in, b_in, w_out)
    assert out2.shape == (n2, 1)
    assert jnp.allclose(out2, ref2, atol=1e-5, rtol=1e-5), float(jnp.max(jnp.abs(out2 - ref2)))

    print("KERNEL_OK")
</pallas_src>

<mosaic_0001>
module attributes {stable_mosaic.version = 11 : i64} {
  func.func @nn_kernel(%arg0: i32, %arg1: memref<8xf32, #tpu.memory_space<smem>>, %arg2: memref<8xf32, #tpu.memory_space<smem>>, %arg3: memref<8xf32, #tpu.memory_space<smem>>, %arg4: memref<8x128xf32, #tpu.memory_space<vmem>>, %arg5: memref<8x128xf32, #tpu.memory_space<vmem>>) attributes {dimension_semantics = [#tpu.dimension_semantics<parallel>], iteration_bounds = array<i64: 1>, scalar_prefetch = 0 : i64, scratch_operands = 0 : i64, tpu.core_type = #tpu.core_type<tc>, window_params = [{transform_indices = @transform_0, window_bounds = array<i64: 8>}, {transform_indices = @transform_1, window_bounds = array<i64: 8>}, {transform_indices = @transform_2, window_bounds = array<i64: 8>}, {transform_indices = @transform_3, window_bounds = array<i64: 8, 128>}, {transform_indices = @transform_4, window_bounds = array<i64: 8, 128>}]} {
    %c0 = arith.constant 0 : index
    %c0_0 = arith.constant 0 : index
    %0 = vector.load %arg4[%c0, %c0_0] : memref<8x128xf32, #tpu.memory_space<vmem>>, vector<8x128xf32>
    %cst = arith.constant 1.000000e+00 : f32
    %1 = vector.broadcast %cst : f32 to vector<8x128xf32>
    %2 = arith.subf %1, %0 : vector<8x128xf32>
    %3 = tpu.reciprocal %2 {approx = true} : vector<8x128xf32> -> vector<8x128xf32>
    %4 = arith.mulf %2, %3 : vector<8x128xf32>
    %cst_1 = arith.constant 2.000000e+00 : f32
    %5 = vector.broadcast %cst_1 : f32 to vector<8x128xf32>
    %6 = arith.subf %5, %4 : vector<8x128xf32>
    %7 = arith.mulf %3, %6 : vector<8x128xf32>
    %8 = arith.mulf %0, %7 : vector<8x128xf32>
    %cst_2 = arith.constant 0.000000e+00 : f32
    %9 = vector.broadcast %cst_2 : f32 to vector<8x128xf32>
    %c0_3 = arith.constant 0 : index
    %10 = memref.load %arg1[%c0_3] : memref<8xf32, #tpu.memory_space<smem>>
    %11 = vector.broadcast %10 : f32 to vector<8x128xf32>
    %12 = arith.mulf %8, %11 : vector<8x128xf32>
    %c0_4 = arith.constant 0 : index
    %13 = memref.load %arg2[%c0_4] : memref<8xf32, #tpu.memory_space<smem>>
    %14 = vector.broadcast %13 : f32 to vector<8x128xf32>
    %15 = arith.addf %12, %14 : vector<8x128xf32>
    %16 = math.tanh %15 : vector<8x128xf32>
    %c0_5 = arith.constant 0 : index
    %17 = memref.load %arg3[%c0_5] : memref<8xf32, #tpu.memory_space<smem>>
    %18 = vector.broadcast %17 : f32 to vector<8x128xf32>
    %19 = arith.mulf %16, %18 : vector<8x128xf32>
    %20 = arith.addf %9, %19 : vector<8x128xf32>
    %c1 = arith.constant 1 : index
    %21 = memref.load %arg1[%c1] : memref<8xf32, #tpu.memory_space<smem>>
    %22 = vector.broadcast %21 : f32 to vector<8x128xf32>
    %23 = arith.mulf %8, %22 : vector<8x128xf32>
    %c1_6 = arith.constant 1 : index
    %24 = memref.load %arg2[%c1_6] : memref<8xf32, #tpu.memory_space<smem>>
    %25 = vector.broadcast %24 : f32 to vector<8x128xf32>
    %26 = arith.addf %23, %25 : vector<8x128xf32>
    %27 = math.tanh %26 : vector<8x128xf32>
    %c1_7 = arith.constant 1 : index
    %28 = memref.load %arg3[%c1_7] : memref<8xf32, #tpu.memory_space<smem>>
    %29 = vector.broadcast %28 : f32 to vector<8x128xf32>
    %30 = arith.mulf %27, %29 : vector<8x128xf32>
    %31 = arith.addf %20, %30 : vector<8x128xf32>
    %c2 = arith.constant 2 : index
    %32 = memref.load %arg1[%c2] : memref<8xf32, #tpu.memory_space<smem>>
    %33 = vector.broadcast %32 : f32 to vector<8x128xf32>
    %34 = arith.mulf %8, %33 : vector<8x128xf32>
    %c2_8 = arith.constant 2 : index
    %35 = memref.load %arg2[%c2_8] : memref<8xf32, #tpu.memory_space<smem>>
    %36 = vector.broadcast %35 : f32 to vector<8x128xf32>
    %37 = arith.addf %34, %36 : vector<8x128xf32>
    %38 = math.tanh %37 : vector<8x128xf32>
    %c2_9 = arith.constant 2 : index
    %39 = memref.load %arg3[%c2_9] : memref<8xf32, #tpu.memory_space<smem>>
    %40 = vector.broadcast %39 : f32 to vector<8x128xf32>
    %41 = arith.mulf %38, %40 : vector<8x128xf32>
    %42 = arith.addf %31, %41 : vector<8x128xf32>
    %c3 = arith.constant 3 : index
    %43 = memref.load %arg1[%c3] : memref<8xf32, #tpu.memory_space<smem>>
    %44 = vector.broadcast %43 : f32 to vector<8x128xf32>
    %45 = arith.mulf %8, %44 : vector<8x128xf32>
    %c3_10 = arith.constant 3 : index
    %46 = memref.load %arg2[%c3_10] : memref<8xf32, #tpu.memory_space<smem>>
    %47 = vector.broadcast %46 : f32 to vector<8x128xf32>
    %48 = arith.addf %45, %47 : vector<8x128xf32>
    %49 = math.tanh %48 : vector<8x128xf32>
    %c3_11 = arith.constant 3 : index
    %50 = memref.load %arg3[%c3_11] : memref<8xf32, #tpu.memory_space<smem>>
    %51 = vector.broadcast %50 : f32 to vector<8x128xf32>
    %52 = arith.mulf %49, %51 : vector<8x128xf32>
    %53 = arith.addf %42, %52 : vector<8x128xf32>
    %c4 = arith.constant 4 : index
    %54 = memref.load %arg1[%c4] : memref<8xf32, #tpu.memory_space<smem>>
    %55 = vector.broadcast %54 : f32 to vector<8x128xf32>
    %56 = arith.mulf %8, %55 : vector<8x128xf32>
    %c4_12 = arith.constant 4 : index
    %57 = memref.load %arg2[%c4_12] : memref<8xf32, #tpu.memory_space<smem>>
    %58 = vector.broadcast %57 : f32 to vector<8x128xf32>
    %59 = arith.addf %56, %58 : vector<8x128xf32>
    %60 = math.tanh %59 : vector<8x128xf32>
    %c4_13 = arith.constant 4 : index
    %61 = memref.load %arg3[%c4_13] : memref<8xf32, #tpu.memory_space<smem>>
    %62 = vector.broadcast %61 : f32 to vector<8x128xf32>
    %63 = arith.mulf %60, %62 : vector<8x128xf32>
    %64 = arith.addf %53, %63 : vector<8x128xf32>
    %c5 = arith.constant 5 : index
    %65 = memref.load %arg1[%c5] : memref<8xf32, #tpu.memory_space<smem>>
    %66 = vector.broadcast %65 : f32 to vector<8x128xf32>
    %67 = arith.mulf %8, %66 : vector<8x128xf32>
    %c5_14 = arith.constant 5 : index
    %68 = memref.load %arg2[%c5_14] : memref<8xf32, #tpu.memory_space<smem>>
    %69 = vector.broadcast %68 : f32 to vector<8x128xf32>
    %70 = arith.addf %67, %69 : vector<8x128xf32>
    %71 = math.tanh %70 : vector<8x128xf32>
    %c5_15 = arith.constant 5 : index
    %72 = memref.load %arg3[%c5_15] : memref<8xf32, #tpu.memory_space<smem>>
    %73 = vector.broadcast %72 : f32 to vector<8x128xf32>
    %74 = arith.mulf %71, %73 : vector<8x128xf32>
    %75 = arith.addf %64, %74 : vector<8x128xf32>
    %c6 = arith.constant 6 : index
    %76 = memref.load %arg1[%c6] : memref<8xf32, #tpu.memory_space<smem>>
    %77 = vector.broadcast %76 : f32 to vector<8x128xf32>
    %78 = arith.mulf %8, %77 : vector<8x128xf32>
    %c6_16 = arith.constant 6 : index
    %79 = memref.load %arg2[%c6_16] : memref<8xf32, #tpu.memory_space<smem>>
    %80 = vector.broadcast %79 : f32 to vector<8x128xf32>
    %81 = arith.addf %78, %80 : vector<8x128xf32>
    %82 = math.tanh %81 : vector<8x128xf32>
    %c6_17 = arith.constant 6 : index
    %83 = memref.load %arg3[%c6_17] : memref<8xf32, #tpu.memory_space<smem>>
    %84 = vector.broadcast %83 : f32 to vector<8x128xf32>
    %85 = arith.mulf %82, %84 : vector<8x128xf32>
    %86 = arith.addf %75, %85 : vector<8x128xf32>
    %c7 = arith.constant 7 : index
    %87 = memref.load %arg1[%c7] : memref<8xf32, #tpu.memory_space<smem>>
    %88 = vector.broadcast %87 : f32 to vector<8x128xf32>
    %89 = arith.mulf %8, %88 : vector<8x128xf32>
    %c7_18 = arith.constant 7 : index
    %90 = memref.load %arg2[%c7_18] : memref<8xf32, #tpu.memory_space<smem>>
    %91 = vector.broadcast %90 : f32 to vector<8x128xf32>
    %92 = arith.addf %89, %91 : vector<8x128xf32>
    %93 = math.tanh %92 : vector<8x128xf32>
    %c7_19 = arith.constant 7 : index
    %94 = memref.load %arg3[%c7_19] : memref<8xf32, #tpu.memory_space<smem>>
    %95 = vector.broadcast %94 : f32 to vector<8x128xf32>
    %96 = arith.mulf %93, %95 : vector<8x128xf32>
    %97 = arith.addf %86, %96 : vector<8x128xf32>
    %cst_20 = arith.constant -2.500000e-01 : f32
    %98 = vector.broadcast %cst_20 : f32 to vector<8x128xf32>
    %99 = arith.mulf %98, %0 : vector<8x128xf32>
    %cst_21 = arith.constant 1.000000e+00 : f32
    %100 = vector.broadcast %cst_21 : f32 to vector<8x128xf32>
    %101 = arith.addf %99, %100 : vector<8x128xf32>
    %cst_22 = arith.constant 0.000000e+00 : f32
    %102 = vector.broadcast %cst_22 : f32 to vector<8x128xf32>
    %103 = arith.subf %0, %102 : vector<8x128xf32>
    %cst_23 = arith.constant 2.000000e+00 : f32
    %104 = vector.broadcast %cst_23 : f32 to vector<8x128xf32>
    %105 = arith.subf %0, %104 : vector<8x128xf32>
    %106 = arith.mulf %103, %105 : vector<8x128xf32>
    %107 = arith.mulf %106, %97 : vector<8x128xf32>
    %108 = arith.addf %101, %107 : vector<8x128xf32>
    %c0_24 = arith.constant 0 : index
    %c0_25 = arith.constant 0 : index
    %109 = vector.load %arg5[%c0_24, %c0_25] : memref<8x128xf32, #tpu.memory_space<vmem>>, vector<8x128xf32>
    tpu.vector_store %arg5[%c0_24, %c0_25], %108 {strides = array<i32>} : memref<8x128xf32, #tpu.memory_space<vmem>>, vector<8x128xf32>,
    return
  }
  func.func @transform_0(%arg0: i32) -> i32 {
    %c0_i32 = arith.constant 0 : i32
    %c0_i32_0 = arith.constant 0 : i32
    return %c0_i32 : i32
  }
  func.func @transform_1(%arg0: i32) -> i32 {
    %c0_i32 = arith.constant 0 : i32
    %c0_i32_0 = arith.constant 0 : i32
    return %c0_i32 : i32
  }
  func.func @transform_2(%arg0: i32) -> i32 {
    %c0_i32 = arith.constant 0 : i32
    %c0_i32_0 = arith.constant 0 : i32
    return %c0_i32 : i32
  }
  func.func @transform_3(%arg0: i32) -> (i32, i32) {
    %c0_i32 = arith.constant 0 : i32
    %c0_i32_0 = arith.constant 0 : i32
    return %arg0, %c0_i32 : i32, i32
  }
  func.func @transform_4(%arg0: i32) -> (i32, i32) {
    %c0_i32 = arith.constant 0 : i32
    %c0_i32_0 = arith.constant 0 : i32
    return %arg0, %c0_i32 : i32, i32
  }
}

</mosaic_0001>

<llo_original>
// kernel: neural_network_forward.1
$region0: #{neural_network_forward.1}
  #allocation0 [shape = 'u32[]', space=smem, size = 0x4, offset = 0x4, fixed_abs, tag = 'smem constant byte address 0x4 - core index']
  #allocation1 [shape = 'u32[144,128]{1,0:T(1,128)}', space=vmem, size = 0x12000, scoped, tag = 'internal scratch']
  %s0 = inlined_call_operand.vmem [shape: f32[8], index: 0, kind: input, shape index: {}]
  %s1 = inlined_call_operand.vmem [shape: f32[8], index: 1, kind: input, shape index: {}]
  %s2 = inlined_call_operand.vmem [shape: f32[8], index: 2, kind: input, shape index: {}]
  %s3 = inlined_call_operand.vmem [shape: f32[8,128], index: 3, kind: input, shape index: {}]
  %s4 = inlined_call_operand.hbm [shape: f32[8,128], index: 4, kind: output, shape index: {}]
  %s5 = sld [smem:[#allocation0]]
  $region38: #{neural_network_forward.1} parent=0
    _
  %s7 = ssub.s32 1, %s5
  %s8 = scalar_select 0, %s7, %s5
  $region1: #{neural_network_forward.1} parent=0
    #allocation2 [shape = 'u8[512]{0}', space=smem, size = 0x200, scoped, tag = 'input window, operand 0, single buffered']
    #allocation3 [shape = 's32[1]{0}', space=sflag, size = 0x4, scoped, tag = 'scoped memory for neural_network_forward.1']
    #allocation4 [shape = 's32[1]{0}', space=sflag, size = 0x4, scoped, tag = 'scoped memory for neural_network_forward.1']
    #allocation5 [shape = 'u8[512]{0}', space=smem, size = 0x200, scoped, tag = 'input window, operand 1, single buffered']
    #allocation6 [shape = 's32[1]{0}', space=sflag, size = 0x4, scoped, tag = 'scoped memory for neural_network_forward.1']
    #allocation7 [shape = 'u8[512]{0}', space=smem, size = 0x200, scoped, tag = 'input window, operand 2, single buffered']
    #allocation8 [shape = 'u8[4096]{0}', space=vmem, size = 0x1000, scoped, tag = 'output window, operand 0, single buffered']
    %9 = vsyncpa [#allocation4], 0
    %10 = vsyncpa [#allocation6], 0
    %11 = vsyncpa [#allocation3], 0
    // Predicated region
    $region2: #{neural_network_forward.1} parent=1 // pred_check
      _
    $region3: #{neural_network_forward.1} parent=1 // pred_check_branch
      %13 = sbr.rel (0) target = $region5
    $region4: #{neural_network_forward.1} parent=1 // pred_region
      %s15 = ssub.s32 16, 16
      %16 = vsyncadd [#allocation4], %s15
      %s18 = sshll.u32 %s0, 4
      %s19 = int_to_ptr.vmem [resolvable:$true] %s18
      %21 = dma.vmem_to_smem %s19, 16, [#allocation2], [#allocation4]
    $region5: #{neural_network_forward.1} parent=1 // pred_fallthru
      _
    // Predicated region
    $region6: #{neural_network_forward.1} parent=1 // pred_check
      _
    $region7: #{neural_network_forward.1} parent=1 // pred_check_branch
      %23 = sbr.rel (0) target = $region9
    $region8: #{neural_network_forward.1} parent=1 // pred_region
      %s25 = ssub.s32 16, 16
      %26 = vsyncadd [#allocation6], %s25
      %s28 = sshll.u32 %s1, 4
      %s29 = int_to_ptr.vmem [resolvable:$true] %s28
      %31 = dma.vmem_to_smem %s29, 16, [#allocation5], [#allocation6]
    $region9: #{neural_network_forward.1} parent=1 // pred_fallthru
      _
    // Predicated region
    $region10: #{neural_network_forward.1} parent=1 // pred_check
      _
    $region11: #{neural_network_forward.1} parent=1 // pred_check_branch
      %33 = sbr.rel (0) target = $region13
    $region12: #{neural_network_forward.1} parent=1 // pred_region
      %s35 = ssub.s32 16, 16
      %36 = vsyncadd [#allocation6], %s35
      %s38 = sshll.u32 %s2, 4
      %s39 = int_to_ptr.vmem [resolvable:$true] %s38
      %41 = dma.vmem_to_smem %s39, 16, [#allocation7], [#allocation6]
    $region13: #{neural_network_forward.1} parent=1 // pred_fallthru
      _
    // Predicated region
    $region14: #{neural_network_forward.1} parent=1 // pred_check
      _
    $region15: #{neural_network_forward.1} parent=1 // pred_check_branch
      %43 = sbr.rel (0) target = $region17
    $region16: #{neural_network_forward.1} parent=1 // pred_region
      _
    $region17: #{neural_network_forward.1} parent=1 // pred_fallthru
      _
    // Predicated region
    $region18: #{neural_network_forward.1} parent=1 // pred_check
      _
    $region19: #{neural_network_forward.1} parent=1 // pred_check_branch
      %45 = sbr.rel (0) target = $region21
    $region20: #{neural_network_forward.1} parent=1 // pred_region
      %46 = dma.done [#allocation4], 16
    $region21: #{neural_network_forward.1} parent=1 // pred_fallthru
      _
    // Predicated region
    $region22: #{neural_network_forward.1} parent=1 // pred_check
      _
    $region23: #{neural_network_forward.1} parent=1 // pred_check_branch
      %48 = sbr.rel (0) target = $region25
    $region24: #{neural_network_forward.1} parent=1 // pred_region
      %49 = dma.done [#allocation6], 16
    $region25: #{neural_network_forward.1} parent=1 // pred_fallthru
      _
    // Predicated region
    $region26: #{neural_network_forward.1} parent=1 // pred_check
      _
    $region27: #{neural_network_forward.1} parent=1 // pred_check_branch
      %51 = sbr.rel (0) target = $region29
    $region28: #{neural_network_forward.1} parent=1 // pred_region
      %52 = dma.done [#allocation6], 16
    $region29: #{neural_network_forward.1} parent=1 // pred_fallthru
      _
    %53 = sfence
    %v54 = vld [vmem:[%s3] sm:$0xff]
    %v55 = vsub.f32 1.0, %v54
    %v56 = vrcp.pop %v55
    %v57 = vmul.f32 %v55, %v56
    %v58 = vsub.f32 2.0, %v57
    %v59 = vmul.f32 %v56, %v58
    %v60 = vmul.f32 %v54, %v59
    %s61 = sld [smem:[#allocation2]]
    %v62 = vstv %s61
    %v63 = vmul.f32 %v60, %v62
    %s64 = sld [smem:[#allocation5]]
    %v65 = vstv %s64
    %v66 = vadd.f32 %v63, %v65
    %v67 = vtanh.pop %v66
    %s68 = sld [smem:[#allocation7]]
    %v69 = vstv %s68
    %v70 = vmul.f32 %v67, %v69
    %v71 = vadd.f32 %v70, 0.0
    %s72 = sld [smem:[#allocation2 + $0x1]]
    %v73 = vstv %s72
    %v74 = vmul.f32 %v60, %v73
    %s75 = sld [smem:[#allocation5 + $0x1]]
    %v76 = vstv %s75
    %v77 = vadd.f32 %v74, %v76
    %v78 = vtanh.pop %v77
    %s79 = sld [smem:[#allocation7 + $0x1]]
    %v80 = vstv %s79
    %v81 = vmul.f32 %v78, %v80
    %v82 = vadd.f32 %v71, %v81
    %s83 = sld [smem:[#allocation2 + $0x2]]
    %v84 = vstv %s83
    %v85 = vmul.f32 %v60, %v84
    %s86 = sld [smem:[#allocation5 + $0x2]]
    %v87 = vstv %s86
    %v88 = vadd.f32 %v85, %v87
    %v89 = vtanh.pop %v88
    %s90 = sld [smem:[#allocation7 + $0x2]]
    %v91 = vstv %s90
    %v92 = vmul.f32 %v89, %v91
    %v93 = vadd.f32 %v82, %v92
    %s94 = sld [smem:[#allocation2 + $0x3]]
    %v95 = vstv %s94
    %v96 = vmul.f32 %v60, %v95
    %s97 = sld [smem:[#allocation5 + $0x3]]
    %v98 = vstv %s97
    %v99 = vadd.f32 %v96, %v98
    %v100 = vtanh.pop %v99
    %s101 = sld [smem:[#allocation7 + $0x3]]
    %v102 = vstv %s101
    %v103 = vmul.f32 %v100, %v102
    %v104 = vadd.f32 %v93, %v103
    %s105 = sld [smem:[#allocation2 + $0x4]]
    %v106 = vstv %s105
    %v107 = vmul.f32 %v60, %v106
    %s108 = sld [smem:[#allocation5 + $0x4]]
    %v109 = vstv %s108
    %v110 = vadd.f32 %v107, %v109
    %v111 = vtanh.pop %v110
    %s112 = sld [smem:[#allocation7 + $0x4]]
    %v113 = vstv %s112
    %v114 = vmul.f32 %v111, %v113
    %v115 = vadd.f32 %v104, %v114
    %s116 = sld [smem:[#allocation2 + $0x5]]
    %v117 = vstv %s116
    %v118 = vmul.f32 %v60, %v117
    %s119 = sld [smem:[#allocation5 + $0x5]]
    %v120 = vstv %s119
    %v121 = vadd.f32 %v118, %v120
    %v122 = vtanh.pop %v121
    %s123 = sld [smem:[#allocation7 + $0x5]]
    %v124 = vstv %s123
    %v125 = vmul.f32 %v122, %v124
    %v126 = vadd.f32 %v115, %v125
    %s127 = sld [smem:[#allocation2 + $0x6]]
    %v128 = vstv %s127
    %v129 = vmul.f32 %v60, %v128
    %s130 = sld [smem:[#allocation5 + $0x6]]
    %v131 = vstv %s130
    %v132 = vadd.f32 %v129, %v131
    %v133 = vtanh.pop %v132
    %s134 = sld [smem:[#allocation7 + $0x6]]
    %v135 = vstv %s134
    %v136 = vmul.f32 %v133, %v135
    %v137 = vadd.f32 %v126, %v136
    %s138 = sld [smem:[#allocation2 + $0x7]]
    %v139 = vstv %s138
    %v140 = vmul.f32 %v60, %v139
    %s141 = sld [smem:[#allocation5 + $0x7]]
    %v142 = vstv %s141
    %v143 = vadd.f32 %v140, %v142
    %v144 = vtanh.pop %v143
    %s145 = sld [smem:[#allocation7 + $0x7]]
    %v146 = vstv %s145
    %v147 = vmul.f32 %v144, %v146
    %v148 = vadd.f32 %v137, %v147
    %v149 = vmul.f32 %v54, -0.25
    %v150 = vadd.f32 %v149, 1.0
    %v151 = vsub.f32 %v54, 2.0
    %v152 = vmul.f32 %v54, %v151
    %v153 = vmul.f32 %v152, %v148
    %v154 = vadd.f32 %v150, %v153
    %155 = vst [vmem:[#allocation8] sm:$0xff] %v154
    // Predicated region
    $region30: #{neural_network_forward.1} parent=1 // pred_check
      _
    $region31: #{neural_network_forward.1} parent=1 // pred_check_branch
      %157 = sbr.rel (0) target = $region33
    $region32: #{neural_network_forward.1} parent=1 // pred_region
      %s159 = ssub.s32 128, 128
      %160 = vsyncadd [#allocation3], %s159
      %s162 = sshll.u32 [#allocation8], 4
      %s163 = int_to_ptr.vmem [resolvable:$true] %s162
      %165 = dma.vmem_to_hbm [thread:$0]  %s163, 128, %s4, [#allocation3]
    $region33: #{neural_network_forward.1} parent=1 // pred_fallthru
      _
    // Predicated region
    $region34: #{neural_network_forward.1} parent=1 // pred_check
      _
    $region35: #{neural_network_forward.1} parent=1 // pred_check_branch
      %167 = sbr.rel (0) target = $region37
    $region36: #{neural_network_forward.1} parent=1 // pred_region
      %168 = dma.done [#allocation3], 128
    $region37: #{neural_network_forward.1} parent=1 // pred_fallthru
      _
    %169 = vsyncpa [#allocation3], 1
    %170 = vsyncpa [#allocation4], 1
    %171 = vsyncpa [#allocation6], 1

</llo_original>
